<compile_context>
chip_gen: v7x
topology: tpu7x:2x2x1
jax: 0.10.0
libtpu: 0.0.40
codegen_flags: <defaults>
</compile_context>

<pallas_src>
import jax
import jax.numpy as jnp
from jax.experimental import pallas as pl
from jax.experimental.pallas import tpu as pltpu

K = 7          # kernel size
STRIDE = 2
PAD = 3
OUT_PAD = 1

# Polyphase formulas for ConvTranspose1d(K=7, s=2, p=3, op=1), w_k = weight[:, :, k]:
#   out[2s]   = y[s-1]@w5 + y[s]@w3 + y[s+1]@w1            + b
#   out[2s+1] = y[s-1]@w6 + y[s]@w4 + y[s+1]@w2 + y[s+2]@w0 + b
_TAPS = {
    0: ((-1, 5), (0, 3), (1, 1)),           # even output sub-phase: (delta, k)
    1: ((-1, 6), (0, 4), (1, 2), (2, 0)),   # odd output sub-phase
}


def _prep_layer1(w, b):
    """Pack layer-1 weights for the im2col patch (taps y[t-1], y[t], y[t+1], y[t+2]).

    w: (Cin, Cout, 7), b: (Cout,) -> W: (4*Cin, 2*Cout) = [even-phase | odd-phase],
    bias: (1, 2*Cout).
    """
    zero = jnp.zeros_like(w[:, :, 0])
    w_even = jnp.concatenate([w[:, :, 5], w[:, :, 3], w[:, :, 1], zero], axis=0)
    w_odd = jnp.concatenate([w[:, :, 6], w[:, :, 4], w[:, :, 2], w[:, :, 0]], axis=0)
    W = jnp.concatenate([w_even, w_odd], axis=1).astype(jnp.float32)   # (4*Cin, 2*Cout)
    bb = jnp.concatenate([b, b]).reshape(1, -1).astype(jnp.float32)    # (1, 2*Cout)
    return W, bb


def _pack_polyphase(w, b, p_in):
    """Pack ConvTranspose1d weights for a layer whose input has `p_in` phases per row.

    Input row u holds phases q (= previous-layer position p_in*u + q).  Output row u
    holds 2*p_in phases r (= position 2*p_in*u + r).  Returns (W_prev, W_cur, W_next)
    of shape (p_in*Cin, 2*p_in*Cout) applied to rows u-1 / u / u+1, and bias (1, 2*p_in*Cout).
    Requires p_in >= 2 (so the +2 tap never reaches row u+2).
    """
    cin, cout, _ = w.shape
    p_out = 2 * p_in
    mats = {s: jnp.zeros((p_in * cin, p_out * cout), jnp.float32) for s in (-1, 0, 1)}
    for p in range(p_in):                       # input sub-phase (position p_in*u + p)
        for e in (0, 1):                        # even/odd output of that position
            r = 2 * p + e                       # output phase (position 2*p_in*u + r)
            for d, k in _TAPS[e]:
                idx = p + d
                s, q = idx // p_in, idx % p_in  # row shift, input phase of the tap
                mats[s] = mats[s].at[q * cin:(q + 1) * cin,
                                     r * cout:(r + 1) * cout].set(
                    w[:, :, k].astype(jnp.float32))
    bias = jnp.tile(b.astype(jnp.float32), p_out).reshape(1, p_out * cout)
    return mats[-1], mats[0], mats[1], bias


def _decoder_kernel(p1_ref, w1_ref, b1_ref,
                    w2m_ref, w2c_ref, w2p_ref, b2_ref,
                    w3m_ref, w3c_ref, w3p_ref, b3_ref,
                    o_ref):
    """One batch element per grid step.  p1_ref: (L, 4*C0), o_ref: (L, 8)."""
    f32 = jnp.float32

    def shifts(r):
        # Row-shifted copies with zero boundary rows, built in-register (no scratch,
        # no store/reload).  r_m1[u] = r[u-1] (0 at u=0); r_p1[u] = r[u+1] (0 at u=L-1).
        z = jnp.zeros((1, r.shape[1]), f32)
        r_m1 = jnp.concatenate([z, r[:-1, :]], axis=0)
        r_p1 = jnp.concatenate([r[1:, :], z], axis=0)
        return r_m1, r_p1

    # ---- layer 1: C0 -> C1, ReLU.  Patch was built in the wrapper. ----
    r1 = jnp.dot(p1_ref[...], w1_ref[...], preferred_element_type=f32) + b1_ref[...]
    r1 = jnp.maximum(r1, 0.0)                         # (L, 2*C1): phases [0 | 1]
    # TODO(synk): Dropout(p=0.2) is eval-mode identity; training-mode mask/scale not implemented.

    # ---- layer 2: C1 -> C2, ReLU.  All 4 output phases lane-packed. ----
    r1_m1, r1_p1 = shifts(r1)
    r2 = (jnp.dot(r1_m1, w2m_ref[...], preferred_element_type=f32)
          + jnp.dot(r1, w2c_ref[...], preferred_element_type=f32)
          + jnp.dot(r1_p1, w2p_ref[...], preferred_element_type=f32)
          + b2_ref[...])
    r2 = jnp.maximum(r2, 0.0)                         # (L, 4*C2): phases [0|1|2|3]

    # ---- layer 3: C2 -> 1, Sigmoid.  All 8 output phases lane-packed per row. ----
    r2_m1, r2_p1 = shifts(r2)
    r3 = (jnp.dot(r2_m1, w3m_ref[...], preferred_element_type=f32)
          + jnp.dot(r2, w3c_ref[...], preferred_element_type=f32)
          + jnp.dot(r2_p1, w3p_ref[...], preferred_element_type=f32)
          + b3_ref[...])                              # (L, 8)
    o_ref[...] = jax.nn.sigmoid(r3)


def decoder_forward(z_ncl, params):
    """Fused Pallas Decoder. z_ncl: (N, latent//4, L) (PyTorch NCL). Returns (N, 8L, 1)."""
    N, C0, L = z_ncl.shape
    C1 = params["w1"].shape[1]
    C2 = params["w3"].shape[1]
    assert params["w4"].shape[1] == 1

    # ---- layer-1 im2col hoisted to the wrapper (tiny; removes in-kernel scratch) ----
    x = jnp.transpose(z_ncl, (0, 2, 1)).astype(jnp.float32)                 # (N, L, C0)
    xp = jnp.pad(x, ((0, 0), (1, 2), (0, 0)))                               # taps -1..+2
    p1 = jnp.concatenate([xp[:, d:d + L, :] for d in range(4)], axis=-1)    # (N, L, 4*C0)

    W1, b1 = _prep_layer1(params["w1"], params["b1"])
    W2m, W2c, W2p, b2 = _pack_polyphase(params["w3"], params["b3"], p_in=2)
    W3m, W3c, W3p, b3 = _pack_polyphase(params["w4"], params["b4"], p_in=4)

    def full(a):  # whole (small) array resident in VMEM, same block every grid step
        return pl.BlockSpec(a.shape, lambda n: (0,) * a.ndim)

    flops = 2 * N * L * (4 * C0 * 2 * C1 + 3 * (2 * C1) * (4 * C2) + 3 * (4 * C2) * 8)
    bytes_accessed = 4 * (p1.size + W1.size + 3 * W2c.size + 3 * W3c.size
                          + b1.size + b2.size + b3.size + N * L * 8)

    out = pl.pallas_call(
        _decoder_kernel,
        out_shape=jax.ShapeDtypeStruct((N, L, 8), jnp.float32),
        grid_spec=pltpu.PrefetchScalarGridSpec(
            num_scalar_prefetch=0,
            grid=(N,),
            in_specs=[
                pl.BlockSpec((None, L, 4 * C0), lambda n: (n, 0, 0)),   # per-batch patch
                full(W1), full(b1),
                full(W2m), full(W2c), full(W2p), full(b2),
                full(W3m), full(W3c), full(W3p), full(b3),
            ],
            out_specs=pl.BlockSpec((None, L, 8), lambda n: (n, 0, 0)),
        ),
        compiler_params=pltpu.CompilerParams(
            dimension_semantics=("parallel",)),
        cost_estimate=pl.CostEstimate(
            flops=flops, transcendentals=N * L * 8, bytes_accessed=bytes_accessed),
    )(p1, W1, b1, W2m, W2c, W2p, b2, W3m, W3c, W3p, b3)

    # (N, L, 8) -> (N, 8L, 1): row-major flatten, free layout plumbing in HBM;
    # equals PyTorch `w.permute(0, 2, 1)`.
    return out.reshape(N, 8 * L, 1)


# ---------------- pure-JAX reference (for correctness check) ----------------
def _ref_convt(x_ncl, w, b):
    # x: (N, Cin, L), w: (Cin, Cout, K)
    y = jax.lax.conv_general_dilated(
        x_ncl,
        jnp.transpose(w[:, :, ::-1], (1, 0, 2)),                # (Cout, Cin, K)
        window_strides=(1,),
        padding=[(K - 1 - PAD, K - 1 - PAD + OUT_PAD)],
        lhs_dilation=(STRIDE,),
        dimension_numbers=("NCH", "OIH", "NCH"),
    )
    return y + b[None, :, None]


def _ref_decoder(z_ncl, params):
    x = jax.nn.relu(_ref_convt(z_ncl, params["w1"], params["b1"]))
    x = jax.nn.relu(_ref_convt(x, params["w3"], params["b3"]))
    x = jax.nn.sigmoid(_ref_convt(x, params["w4"], params["b4"]))
    return jnp.transpose(x, (0, 2, 1))


# ---------------------------------- main -----------------------------------
if __name__ == "__main__":
    latent_size = 32
    L = 8                                                       # input sequence length
    N = 2

    c1_in, c1_out = latent_size // 4, latent_size // 2          # 8 -> 16
    c3_in, c3_out = latent_size // 2, latent_size               # 16 -> 32
    c4_in, c4_out = latent_size, 1                              # 32 -> 1

    key = jax.random.PRNGKey(0)
    ks = jax.random.split(key, 8)

    def init_w(k, cin, cout):
        bound = 1.0 / jnp.sqrt(cout * K)
        return jax.random.uniform(k, (cin, cout, K), jnp.float32, -bound, bound)

    def init_b(k, cout):
        bound = 1.0 / jnp.sqrt(cout * K)
        return jax.random.uniform(k, (cout,), jnp.float32, -bound, bound)

    params = {
        "w1": init_w(ks[0], c1_in, c1_out), "b1": init_b(ks[1], c1_out),
        "w3": init_w(ks[2], c3_in, c3_out), "b3": init_b(ks[3], c3_out),
        "w4": init_w(ks[4], c4_in, c4_out), "b4": init_b(ks[5], c4_out),
    }

    z = jax.random.normal(ks[6], (N, c1_in, L), jnp.float32)    # (N, latent//4, L)

    fwd = jax.jit(decoder_forward)
    out = jax.block_until_ready(fwd(z, params))
    ref = jax.block_until_ready(_ref_decoder(z, params))

    assert out.shape == (N, 8 * L, 1), out.shape
    assert jnp.allclose(out, ref, atol=1e-4, rtol=1e-4), float(jnp.max(jnp.abs(out - ref)))

    print("KERNEL_OK")
</pallas_src>

<mosaic_0001>
module attributes {stable_mosaic.version = 11 : i64} {
  func.func @_decoder_kernel(%arg0: i32, %arg1: memref<1x8x32xf32, #tpu.memory_space<vmem>>, %arg2: memref<32x32xf32, #tpu.memory_space<vmem>>, %arg3: memref<1x32xf32, #tpu.memory_space<vmem>>, %arg4: memref<32x128xf32, #tpu.memory_space<vmem>>, %arg5: memref<32x128xf32, #tpu.memory_space<vmem>>, %arg6: memref<32x128xf32, #tpu.memory_space<vmem>>, %arg7: memref<1x128xf32, #tpu.memory_space<vmem>>, %arg8: memref<128x8xf32, #tpu.memory_space<vmem>>, %arg9: memref<128x8xf32, #tpu.memory_space<vmem>>, %arg10: memref<128x8xf32, #tpu.memory_space<vmem>>, %arg11: memref<1x8xf32, #tpu.memory_space<vmem>>, %arg12: memref<1x8x8xf32, #tpu.memory_space<vmem>>) attributes {dimension_semantics = [#tpu.dimension_semantics<parallel>], iteration_bounds = array<i64: 2>, scalar_prefetch = 0 : i64, scratch_operands = 0 : i64, tpu.core_type = #tpu.core_type<tc>, window_params = [{transform_indices = @transform_0, window_bounds = array<i64: 1, 8, 32>}, {pipeline_mode = #tpu.pipeline_mode<synchronous>, transform_indices = @transform_1, window_bounds = array<i64: 32, 32>}, {pipeline_mode = #tpu.pipeline_mode<synchronous>, transform_indices = @transform_2, window_bounds = array<i64: 1, 32>}, {pipeline_mode = #tpu.pipeline_mode<synchronous>, transform_indices = @transform_3, window_bounds = array<i64: 32, 128>}, {pipeline_mode = #tpu.pipeline_mode<synchronous>, transform_indices = @transform_4, window_bounds = array<i64: 32, 128>}, {pipeline_mode = #tpu.pipeline_mode<synchronous>, transform_indices = @transform_5, window_bounds = array<i64: 32, 128>}, {pipeline_mode = #tpu.pipeline_mode<synchronous>, transform_indices = @transform_6, window_bounds = array<i64: 1, 128>}, {pipeline_mode = #tpu.pipeline_mode<synchronous>, transform_indices = @transform_7, window_bounds = array<i64: 128, 8>}, {pipeline_mode = #tpu.pipeline_mode<synchronous>, transform_indices = @transform_8, window_bounds = array<i64: 128, 8>}, {pipeline_mode = #tpu.pipeline_mode<synchronous>, transform_indices = @transform_9, window_bounds = array<i64: 128, 8>}, {pipeline_mode = #tpu.pipeline_mode<synchronous>, transform_indices = @transform_10, window_bounds = array<i64: 1, 8>}, {transform_indices = @transform_11, window_bounds = array<i64: 1, 8, 8>}]} {
    %c0 = arith.constant 0 : index
    %c0_0 = arith.constant 0 : index
    %c0_1 = arith.constant 0 : index
    %0 = vector.load %arg1[%c0, %c0_0, %c0_1] : memref<1x8x32xf32, #tpu.memory_space<vmem>>, vector<1x8x32xf32>
    %1 = vector.shape_cast %0 : vector<1x8x32xf32> to vector<8x32xf32>
    %c0_2 = arith.constant 0 : index
    %c0_3 = arith.constant 0 : index
    %2 = vector.load %arg2[%c0_2, %c0_3] : memref<32x32xf32, #tpu.memory_space<vmem>>, vector<32x32xf32>
    %cst = arith.constant dense<0.000000e+00> : vector<8x32xf32>
    %3 = tpu.matmul %1, %2, %cst {dimension_numbers = #tpu.dot_dimension_numbers<[1], [0], [0], [1], [0, 0, 1, 1], [], []>} : vector<8x32xf32>, vector<32x32xf32>, vector<8x32xf32> -> vector<8x32xf32>
    %c0_4 = arith.constant 0 : index
    %c0_5 = arith.constant 0 : index
    %4 = vector.load %arg3[%c0_4, %c0_5] : memref<1x32xf32, #tpu.memory_space<vmem>>, vector<1x32xf32>
    %5 = vector.broadcast %4 : vector<1x32xf32> to vector<8x32xf32>
    %6 = arith.addf %3, %5 : vector<8x32xf32>
    %cst_6 = arith.constant 0.000000e+00 : f32
    %7 = vector.broadcast %cst_6 : f32 to vector<8x32xf32>
    %8 = arith.maximumf %6, %7 : vector<8x32xf32>
    %cst_7 = arith.constant 0.000000e+00 : f32
    %9 = vector.broadcast %cst_7 : f32 to vector<1x32xf32>
    %10 = vector.extract_strided_slice %8 {offsets = [0, 0], sizes = [7, 32], strides = [1, 1]} : vector<8x32xf32> to vector<7x32xf32>
    %11 = tpu.concatenate %9, %10 in 0 : vector<1x32xf32>, vector<7x32xf32> -> vector<8x32xf32>
    %12 = vector.extract_strided_slice %8 {offsets = [1, 0], sizes = [7, 32], strides = [1, 1]} : vector<8x32xf32> to vector<7x32xf32>
    %13 = tpu.concatenate %12, %9 in 0 : vector<7x32xf32>, vector<1x32xf32> -> vector<8x32xf32>
    %c0_8 = arith.constant 0 : index
    %c0_9 = arith.constant 0 : index
    %14 = vector.load %arg4[%c0_8, %c0_9] : memref<32x128xf32, #tpu.memory_space<vmem>>, vector<32x128xf32>
    %cst_10 = arith.constant dense<0.000000e+00> : vector<8x128xf32>
    %15 = tpu.matmul %11, %14, %cst_10 {dimension_numbers = #tpu.dot_dimension_numbers<[1], [0], [0], [1], [0, 0, 1, 1], [], []>} : vector<8x32xf32>, vector<32x128xf32>, vector<8x128xf32> -> vector<8x128xf32>
    %c0_11 = arith.constant 0 : index
    %c0_12 = arith.constant 0 : index
    %16 = vector.load %arg5[%c0_11, %c0_12] : memref<32x128xf32, #tpu.memory_space<vmem>>, vector<32x128xf32>
    %cst_13 = arith.constant dense<0.000000e+00> : vector<8x128xf32>
    %17 = tpu.matmul %8, %16, %cst_13 {dimension_numbers = #tpu.dot_dimension_numbers<[1], [0], [0], [1], [0, 0, 1, 1], [], []>} : vector<8x32xf32>, vector<32x128xf32>, vector<8x128xf32> -> vector<8x128xf32>
    %18 = arith.addf %15, %17 : vector<8x128xf32>
    %c0_14 = arith.constant 0 : index
    %c0_15 = arith.constant 0 : index
    %19 = vector.load %arg6[%c0_14, %c0_15] : memref<32x128xf32, #tpu.memory_space<vmem>>, vector<32x128xf32>
    %cst_16 = arith.constant dense<0.000000e+00> : vector<8x128xf32>
    %20 = tpu.matmul %13, %19, %cst_16 {dimension_numbers = #tpu.dot_dimension_numbers<[1], [0], [0], [1], [0, 0, 1, 1], [], []>} : vector<8x32xf32>, vector<32x128xf32>, vector<8x128xf32> -> vector<8x128xf32>
    %21 = arith.addf %18, %20 : vector<8x128xf32>
    %c0_17 = arith.constant 0 : index
    %c0_18 = arith.constant 0 : index
    %22 = vector.load %arg7[%c0_17, %c0_18] : memref<1x128xf32, #tpu.memory_space<vmem>>, vector<1x128xf32>
    %23 = vector.broadcast %22 : vector<1x128xf32> to vector<8x128xf32>
    %24 = arith.addf %21, %23 : vector<8x128xf32>
    %cst_19 = arith.constant 0.000000e+00 : f32
    %25 = vector.broadcast %cst_19 : f32 to vector<8x128xf32>
    %26 = arith.maximumf %24, %25 : vector<8x128xf32>
    %cst_20 = arith.constant 0.000000e+00 : f32
    %27 = vector.broadcast %cst_20 : f32 to vector<1x128xf32>
    %28 = vector.extract_strided_slice %26 {offsets = [0, 0], sizes = [7, 128], strides = [1, 1]} : vector<8x128xf32> to vector<7x128xf32>
    %29 = tpu.concatenate %27, %28 in 0 : vector<1x128xf32>, vector<7x128xf32> -> vector<8x128xf32>
    %30 = vector.extract_strided_slice %26 {offsets = [1, 0], sizes = [7, 128], strides = [1, 1]} : vector<8x128xf32> to vector<7x128xf32>
    %31 = tpu.concatenate %30, %27 in 0 : vector<7x128xf32>, vector<1x128xf32> -> vector<8x128xf32>
    %c0_21 = arith.constant 0 : index
    %c0_22 = arith.constant 0 : index
    %32 = vector.load %arg8[%c0_21, %c0_22] : memref<128x8xf32, #tpu.memory_space<vmem>>, vector<128x8xf32>
    %cst_23 = arith.constant dense<0.000000e+00> : vector<8x8xf32>
    %33 = tpu.matmul %29, %32, %cst_23 {dimension_numbers = #tpu.dot_dimension_numbers<[1], [0], [0], [1], [0, 0, 1, 1], [], []>} : vector<8x128xf32>, vector<128x8xf32>, vector<8x8xf32> -> vector<8x8xf32>
    %c0_24 = arith.constant 0 : index
    %c0_25 = arith.constant 0 : index
    %34 = vector.load %arg9[%c0_24, %c0_25] : memref<128x8xf32, #tpu.memory_space<vmem>>, vector<128x8xf32>
    %cst_26 = arith.constant dense<0.000000e+00> : vector<8x8xf32>
    %35 = tpu.matmul %26, %34, %cst_26 {dimension_numbers = #tpu.dot_dimension_numbers<[1], [0], [0], [1], [0, 0, 1, 1], [], []>} : vector<8x128xf32>, vector<128x8xf32>, vector<8x8xf32> -> vector<8x8xf32>
    %36 = arith.addf %33, %35 : vector<8x8xf32>
    %c0_27 = arith.constant 0 : index
    %c0_28 = arith.constant 0 : index
    %37 = vector.load %arg10[%c0_27, %c0_28] : memref<128x8xf32, #tpu.memory_space<vmem>>, vector<128x8xf32>
    %cst_29 = arith.constant dense<0.000000e+00> : vector<8x8xf32>
    %38 = tpu.matmul %31, %37, %cst_29 {dimension_numbers = #tpu.dot_dimension_numbers<[1], [0], [0], [1], [0, 0, 1, 1], [], []>} : vector<8x128xf32>, vector<128x8xf32>, vector<8x8xf32> -> vector<8x8xf32>
    %39 = arith.addf %36, %38 : vector<8x8xf32>
    %c0_30 = arith.constant 0 : index
    %c0_31 = arith.constant 0 : index
    %40 = vector.load %arg11[%c0_30, %c0_31] : memref<1x8xf32, #tpu.memory_space<vmem>>, vector<1x8xf32>
    %41 = vector.broadcast %40 : vector<1x8xf32> to vector<8x8xf32>
    %42 = arith.addf %39, %41 : vector<8x8xf32>
    %43 = arith.negf %42 : vector<8x8xf32>
    %44 = math.exp %43 : vector<8x8xf32>
    %cst_32 = arith.constant 1.000000e+00 : f32
    %45 = vector.broadcast %cst_32 : f32 to vector<8x8xf32>
    %46 = arith.addf %45, %44 : vector<8x8xf32>
    %47 = arith.divf %45, %46 : vector<8x8xf32>
    %c0_33 = arith.constant 0 : index
    %c0_34 = arith.constant 0 : index
    %c0_35 = arith.constant 0 : index
    %48 = vector.load %arg12[%c0_33, %c0_34, %c0_35] : memref<1x8x8xf32, #tpu.memory_space<vmem>>, vector<1x8x8xf32>
    %49 = vector.shape_cast %48 : vector<1x8x8xf32> to vector<8x8xf32>
    %50 = vector.shape_cast %47 : vector<8x8xf32> to vector<1x8x8xf32>
    tpu.vector_store %arg12[%c0_33, %c0_34, %c0_35], %50 {strides = array<i32>} : memref<1x8x8xf32, #tpu.memory_space<vmem>>, vector<1x8x8xf32>,
    return
  }
  func.func @transform_0(%arg0: i32) -> (i32, i32, i32) {
    %c0_i32 = arith.constant 0 : i32
    %c0_i32_0 = arith.constant 0 : i32
    %c0_i32_1 = arith.constant 0 : i32
    return %arg0, %c0_i32, %c0_i32_0 : i32, i32, i32
  }
  func.func @transform_1(%arg0: i32) -> (i32, i32) {
    %c0_i32 = arith.constant 0 : i32
    %c0_i32_0 = arith.constant 0 : i32
    %c0_i32_1 = arith.constant 0 : i32
    return %c0_i32, %c0_i32_0 : i32, i32
  }
  func.func @transform_2(%arg0: i32) -> (i32, i32) {
    %c0_i32 = arith.constant 0 : i32
    %c0_i32_0 = arith.constant 0 : i32
    %c0_i32_1 = arith.constant 0 : i32
    return %c0_i32, %c0_i32_0 : i32, i32
  }
  func.func @transform_3(%arg0: i32) -> (i32, i32) {
    %c0_i32 = arith.constant 0 : i32
    %c0_i32_0 = arith.constant 0 : i32
    %c0_i32_1 = arith.constant 0 : i32
    return %c0_i32, %c0_i32_0 : i32, i32
  }
  func.func @transform_4(%arg0: i32) -> (i32, i32) {
    %c0_i32 = arith.constant 0 : i32
    %c0_i32_0 = arith.constant 0 : i32
    %c0_i32_1 = arith.constant 0 : i32
    return %c0_i32, %c0_i32_0 : i32, i32
  }
  func.func @transform_5(%arg0: i32) -> (i32, i32) {
    %c0_i32 = arith.constant 0 : i32
    %c0_i32_0 = arith.constant 0 : i32
    %c0_i32_1 = arith.constant 0 : i32
    return %c0_i32, %c0_i32_0 : i32, i32
  }
  func.func @transform_6(%arg0: i32) -> (i32, i32) {
    %c0_i32 = arith.constant 0 : i32
    %c0_i32_0 = arith.constant 0 : i32
    %c0_i32_1 = arith.constant 0 : i32
    return %c0_i32, %c0_i32_0 : i32, i32
  }
  func.func @transform_7(%arg0: i32) -> (i32, i32) {
    %c0_i32 = arith.constant 0 : i32
    %c0_i32_0 = arith.constant 0 : i32
    %c0_i32_1 = arith.constant 0 : i32
    return %c0_i32, %c0_i32_0 : i32, i32
  }
  func.func @transform_8(%arg0: i32) -> (i32, i32) {
    %c0_i32 = arith.constant 0 : i32
    %c0_i32_0 = arith.constant 0 : i32
    %c0_i32_1 = arith.constant 0 : i32
    return %c0_i32, %c0_i32_0 : i32, i32
  }
  func.func @transform_9(%arg0: i32) -> (i32, i32) {
    %c0_i32 = arith.constant 0 : i32
    %c0_i32_0 = arith.constant 0 : i32
    %c0_i32_1 = arith.constant 0 : i32
    return %c0_i32, %c0_i32_0 : i32, i32
  }
  func.func @transform_10(%arg0: i32) -> (i32, i32) {
    %c0_i32 = arith.constant 0 : i32
    %c0_i32_0 = arith.constant 0 : i32
    %c0_i32_1 = arith.constant 0 : i32
    return %c0_i32, %c0_i32_0 : i32, i32
  }
  func.func @transform_11(%arg0: i32) -> (i32, i32, i32) {
    %c0_i32 = arith.constant 0 : i32
    %c0_i32_0 = arith.constant 0 : i32
    %c0_i32_1 = arith.constant 0 : i32
    return %arg0, %c0_i32, %c0_i32_0 : i32, i32, i32
  }
}

</mosaic_0001>

<llo_original>
// kernel: tile.13
$region0: #{tile.13}
  #allocation0 [shape = 's32[1]{0}', space=sflag, size = 0x4, scoped, tag = 'scoped memory for tile.13']
  %s0 = inlined_call_operand.vmem [shape: f32[32], index: 0, kind: input, shape index: {}]
  %s1 = inlined_call_operand.vmem [shape: f32[4,32], index: 1, kind: output, shape index: {}]
  // Predicated region
  $region2: #{tile.13} parent=0 // pred_check
    _
  $region3: #{tile.13} parent=0 // pred_check_branch
    %3 = sbr.rel (0) target = $region5
  $region4: #{tile.13} parent=0 // pred_region
    _
  $region5: #{tile.13} parent=0 // pred_fallthru
    _
  %v4 = vld [vmem:[%s0] ss:$0 sm:$0xff]
  %5 = vst [vmem:[%s1] sm:$0xf] %v4

// kernel: tile.14
$region0: #{tile.14}
  %s0 = inlined_call_operand.vmem [shape: f32[4,32], index: 0, kind: input, shape index: {}]
  %s1 = inlined_call_operand.vmem [shape: f32[1,128], index: 1, kind: output, shape index: {}]
  $region1: #{tile.14} parent=0
    #allocation0 [shape = 'u8[4096]{0}', space=vmem, size = 0x1000, scoped, tag = 'scoped mem for output reshape']
    #allocation1 [shape = 'u8[4096]{0}', space=vmem, size = 0x1000, scoped, tag = 'scoped mem for input reshape']
    %s3 = sshllo.u32 0, 4
    %v4 = vld [vmem:[%s0] sm:%s3]
    %5 = vst [vmem:[#allocation1] sm:%s3] %v4
    %v6 = vld [vmem:[#allocation1] sm:$0x1]
    %vm7 = vcmask 261120
    %8 = vst.msk [vmem:[#allocation0] sm:$0x1] %vm7, %v6
    %s9 = scalar_lea.vmem [#allocation1], 3
    %v10 = vld [vmem:[%s9] sm:$0x1]
    %11 = vrot.lane.b32.xlu0 %v10, 96
    %v12 = vpop.permute.xlu0 %11
    %vm13 = vcmask 1048320
    %14 = vst.msk [vmem:[#allocation0] sm:$0x1] %vm13, %v12
    %s15 = scalar_lea.vmem [#allocation1], 2
    %v16 = vld [vmem:[%s15] sm:$0x1]
    %17 = vrot.lane.b32.xlu0 %v16, 64
    %v18 = vpop.permute.xlu0 %17
    %vm19 = vcmask 785920
    %20 = vst.msk [vmem:[#allocation0] sm:$0x1] %vm19, %v18
    %s21 = scalar_lea.vmem [#allocation1], 1
    %v22 = vld [vmem:[%s21] sm:$0x1]
    %23 = vrot.lane.b32.xlu0 %v22, 32
    %v24 = vpop.permute.xlu0 %23
    %vm25 = vcmask 523520
    %26 = vst.msk [vmem:[#allocation0] sm:$0x1] %vm25, %v24
    %s28 = sshllo.u32 0, 1
    %v30 = vld [vmem:[#allocation0] sm:%s28]
    %s31 = sshllo.u32 0, 1
    %32 = vst [vmem:[%s1] sm:%s31] %v30

// kernel: decoder_forward.1
$region0: #{decoder_forward.1}
  #allocation0 [shape = 'u32[]', space=smem, size = 0x4, offset = 0x4, fixed_abs, tag = 'smem constant byte address 0x4 - core index']
  #allocation1 [shape = 'u32[144,128]{1,0:T(1,128)}', space=vmem, size = 0x12000, scoped, tag = 'internal scratch']
  %s0 = inlined_call_operand.vmem [shape: f32[2,8,32], index: 0, kind: input, shape index: {}]
  %s1 = inlined_call_operand.vmem [shape: f32[32,32], index: 1, kind: input, shape index: {}]
  %s2 = inlined_call_operand.vmem [shape: f32[1,32], index: 2, kind: input, shape index: {}]
  %s3 = inlined_call_operand.vmem [shape: f32[32,128], index: 3, kind: input, shape index: {}]
  %s4 = inlined_call_operand.vmem [shape: f32[32,128], index: 4, kind: input, shape index: {}]
  %s5 = inlined_call_operand.vmem [shape: f32[32,128], index: 5, kind: input, shape index: {}]
  %s6 = inlined_call_operand.vmem [shape: f32[1,128], index: 6, kind: input, shape index: {}]
  %s7 = inlined_call_operand.vmem [shape: f32[128,8], index: 7, kind: input, shape index: {}]
  %s8 = inlined_call_operand.vmem [shape: f32[128,8], index: 8, kind: input, shape index: {}]
  %s9 = inlined_call_operand.vmem [shape: f32[128,8], index: 9, kind: input, shape index: {}]
  %s10 = inlined_call_operand.vmem [shape: f32[1,8], index: 10, kind: input, shape index: {}]
  %s11 = inlined_call_operand.vmem [shape: f32[2,8,8], index: 11, kind: output, shape index: {}]
  %s12 = sld [smem:[#allocation0]]
  $region77: #{decoder_forward.1} parent=0
    _
  %s14 = ssub.s32 1, %s12
  %s15 = scalar_select 0, %s14, %s12
  loop: start=0, step=1, limit=4
  $region2: #{decoder_forward.1} parent=0 // loop_pre_header
    _
  $region3: #{decoder_forward.1} parent=0 // loop_header
    %s17 = sphi 0, %s21
    %p18 = scmp.ge.s32.totalorder %s17, 4
    %s27 = sphi 0, %s29
    %s30 = sphi 0, %s27
    %s31 = sphi 0, %s30
    %s47 = sphi 0, %s31
    %s51 = sphi 0, %s51
    %s53 = sphi 0, %s51
    %s54 = sphi 0, %s53
    %s68 = sphi 0, %s54
    %s72 = sphi 0, %s72
    %s74 = sphi 0, %s72
    %s75 = sphi 0, %s74
    %s89 = sphi 0, %s75
    %s93 = sphi 0, %s93
    %s95 = sphi 0, %s93
    %s96 = sphi 0, %s95
    %s110 = sphi 0, %s96
    %s114 = sphi 0, %s114
    %s116 = sphi 0, %s114
    %s117 = sphi 0, %s116
    %s131 = sphi 0, %s117
    %s135 = sphi 0, %s135
    %s137 = sphi 0, %s135
    %s138 = sphi 0, %s137
    %s152 = sphi 0, %s138
    %s156 = sphi 0, %s156
    %s158 = sphi 0, %s156
    %s159 = sphi 0, %s158
    %s173 = sphi 0, %s159
    %s177 = sphi 0, %s177
    %s179 = sphi 0, %s177
    %s180 = sphi 0, %s179
    %s194 = sphi 0, %s180
    %s198 = sphi 0, %s198
    %s200 = sphi 0, %s198
    %s201 = sphi 0, %s200
    %s215 = sphi 0, %s201
    %s219 = sphi 0, %s219
    %s221 = sphi 0, %s219
    %s222 = sphi 0, %s221
    %s236 = sphi 0, %s222
    %s240 = sphi 0, %s240
    %s242 = sphi 0, %s240
    %s243 = sphi 0, %s242
    %s257 = sphi 0, %s243
    %s263 = sphi 0, %s265
    %s266 = sphi 0, %s263
    %s267 = sphi 0, %s266
    %s283 = sphi 0, %s267
  $region4: #{decoder_forward.1} parent=0 // loop_header_branch
    %20 = sbr.rel (%p18) target = $region8
  $region5: #{decoder_forward.1} parent=0 // loop_body
    %s22 = ssub.s32 %s17, 1
    %s23 = ssub.s32 %s17, 2
    %s24 = sadd.s32 %s17, 1
    %s25 = ssub.s32 %s17, %s24
    %p26 = scmp.eq.s32.totalorder %s25, 0
    %s28 = sadd.s32 %s27, 1
    %s29 = scalar_select %p26, %s27, %s28
    %p32 = pneg %p26
    %p33 = scmp.eq.s32.totalorder %s17, 1
    %p34 = por %p32, %p33
    %p35 = scmp.ne.s32.totalorder %s27, %s30
    %p36 = scmp.eq.s32.totalorder %s17, 0
    %p37 = por %p35, %p36
    %p38 = scmp.ne.s32.totalorder %s27, %s30
    %p39 = scmp.eq.s32.totalorder %s22, 1
    %p40 = por %p38, %p39
    %p41 = scmp.ne.s32.totalorder %s30, %s31
    %p42 = scmp.eq.s32.totalorder %s22, 0
    %p43 = por %p41, %p42
    %p44 = scmp.ne.s32.totalorder %s30, %s31
    %p45 = scmp.eq.s32.totalorder %s23, 1
    %p46 = por %p44, %p45
    %p48 = scmp.ne.s32.totalorder %s31, %s47
    %p49 = scmp.eq.s32.totalorder %s23, 0
    %p50 = por %p48, %p49
    %s52 = sadd.s32 %s51, 1
    %p55 = scmp.eq.s32.totalorder %s17, 1
    %p56 = scmp.ne.s32.totalorder %s51, %s53
    %p57 = scmp.eq.s32.totalorder %s17, 0
    %p58 = por %p56, %p57
    %p59 = scmp.ne.s32.totalorder %s51, %s53
    %p60 = scmp.eq.s32.totalorder %s22, 1
    %p61 = por %p59, %p60
    %p62 = scmp.ne.s32.totalorder %s53, %s54
    %p63 = scmp.eq.s32.totalorder %s22, 0
    %p64 = por %p62, %p63
    %p65 = scmp.ne.s32.totalorder %s53, %s54
    %p66 = scmp.eq.s32.totalorder %s23, 1
    %p67 = por %p65, %p66
    %p69 = scmp.ne.s32.totalorder %s54, %s68
    %p70 = scmp.eq.s32.totalorder %s23, 0
    %p71 = por %p69, %p70
    %s73 = sadd.s32 %s72, 1
    %p76 = scmp.eq.s32.totalorder %s17, 1
    %p77 = scmp.ne.s32.totalorder %s72, %s74
    %p78 = scmp.eq.s32.totalorder %s17, 0
    %p79 = por %p77, %p78
    %p80 = scmp.ne.s32.totalorder %s72, %s74
    %p81 = scmp.eq.s32.totalorder %s22, 1
    %p82 = por %p80, %p81
    %p83 = scmp.ne.s32.totalorder %s74, %s75
    %p84 = scmp.eq.s32.totalorder %s22, 0
    %p85 = por %p83, %p84
    %p86 = scmp.ne.s32.totalorder %s74, %s75
    %p87 = scmp.eq.s32.totalorder %s23, 1
    %p88 = por %p86, %p87
    %p90 = scmp.ne.s32.totalorder %s75, %s89
    %p91 = scmp.eq.s32.totalorder %s23, 0
    %p92 = por %p90, %p91
    %s94 = sadd.s32 %s93, 1
    %p97 = scmp.eq.s32.totalorder %s17, 1
    %p98 = scmp.ne.s32.totalorder %s93, %s95
    %p99 = scmp.eq.s32.totalorder %s17, 0
    %p100 = por %p98, %p99
    %p101 = scmp.ne.s32.totalorder %s93, %s95
    %p102 = scmp.eq.s32.totalorder %s22, 1
    %p103 = por %p101, %p102
    %p104 = scmp.ne.s32.totalorder %s95, %s96
    %p105 = scmp.eq.s32.totalorder %s22, 0
    %p106 = por %p104, %p105
    %p107 = scmp.ne.s32.totalorder %s95, %s96
    %p108 = scmp.eq.s32.totalorder %s23, 1
    %p109 = por %p107, %p108
    %p111 = scmp.ne.s32.totalorder %s96, %s110
    %p112 = scmp.eq.s32.totalorder %s23, 0
    %p113 = por %p111, %p112
    %s115 = sadd.s32 %s114, 1
    %p118 = scmp.eq.s32.totalorder %s17, 1
    %p119 = scmp.ne.s32.totalorder %s114, %s116
    %p120 = scmp.eq.s32.totalorder %s17, 0
    %p121 = por %p119, %p120
    %p122 = scmp.ne.s32.totalorder %s114, %s116
    %p123 = scmp.eq.s32.totalorder %s22, 1
    %p124 = por %p122, %p123
    %p125 = scmp.ne.s32.totalorder %s116, %s117
    %p126 = scmp.eq.s32.totalorder %s22, 0
    %p127 = por %p125, %p126
    %p128 = scmp.ne.s32.totalorder %s116, %s117
    %p129 = scmp.eq.s32.totalorder %s23, 1
    %p130 = por %p128, %p129
    %p132 = scmp.ne.s32.totalorder %s117, %s131
    %p133 = scmp.eq.s32.totalorder %s23, 0
    %p134 = por %p132, %p133
    %s136 = sadd.s32 %s135, 1
    %p139 = scmp.eq.s32.totalorder %s17, 1
    %p140 = scmp.ne.s32.totalorder %s135, %s137
    %p141 = scmp.eq.s32.totalorder %s17, 0
    %p142 = por %p140, %p141
    %p143 = scmp.ne.s32.totalorder %s135, %s137
    %p144 = scmp.eq.s32.totalorder %s22, 1
    %p145 = por %p143, %p144
    %p146 = scmp.ne.s32.totalorder %s137, %s138
    %p147 = scmp.eq.s32.totalorder %s22, 0
    %p148 = por %p146, %p147
    %p149 = scmp.ne.s32.totalorder %s137, %s138
    %p150 = scmp.eq.s32.totalorder %s23, 1
    %p151 = por %p149, %p150
    %p153 = scmp.ne.s32.totalorder %s138, %s152
    %p154 = scmp.eq.s32.totalorder %s23, 0
    %p155 = por %p153, %p154
    %s157 = sadd.s32 %s156, 1
    %p160 = scmp.eq.s32.totalorder %s17, 1
    %p161 = scmp.ne.s32.totalorder %s156, %s158
    %p162 = scmp.eq.s32.totalorder %s17, 0
    %p163 = por %p161, %p162
    %p164 = scmp.ne.s32.totalorder %s156, %s158
    %p165 = scmp.eq.s32.totalorder %s22, 1
    %p166 = por %p164, %p165
    %p167 = scmp.ne.s32.totalorder %s158, %s159
    %p168 = scmp.eq.s32.totalorder %s22, 0
    %p169 = por %p167, %p168
    %p170 = scmp.ne.s32.totalorder %s158, %s159
    %p171 = scmp.eq.s32.totalorder %s23, 1
    %p172 = por %p170, %p171
    %p174 = scmp.ne.s32.totalorder %s159, %s173
    %p175 = scmp.eq.s32.totalorder %s23, 0
    %p176 = por %p174, %p175
    %s178 = sadd.s32 %s177, 1
    %p181 = scmp.eq.s32.totalorder %s17, 1
    %p182 = scmp.ne.s32.totalorder %s177, %s179
    %p183 = scmp.eq.s32.totalorder %s17, 0
    %p184 = por %p182, %p183
    %p185 = scmp.ne.s32.totalorder %s177, %s179
    %p186 = scmp.eq.s32.totalorder %s22, 1
    %p187 = por %p185, %p186
    %p188 = scmp.ne.s32.totalorder %s179, %s180
    %p189 = scmp.eq.s32.totalorder %s22, 0
    %p190 = por %p188, %p189
    %p191 = scmp.ne.s32.totalorder %s179, %s180
    %p192 = scmp.eq.s32.totalorder %s23, 1
    %p193 = por %p191, %p192
    %p195 = scmp.ne.s32.totalorder %s180, %s194
    %p196 = scmp.eq.s32.totalorder %s23, 0
    %p197 = por %p195, %p196
    %s199 = sadd.s32 %s198, 1
    %p202 = scmp.eq.s32.totalorder %s17, 1
    %p203 = scmp.ne.s32.totalorder %s198, %s200
    %p204 = scmp.eq.s32.totalorder %s17, 0
    %p205 = por %p203, %p204
    %p206 = scmp.ne.s32.totalorder %s198, %s200
    %p207 = scmp.eq.s32.totalorder %s22, 1
    %p208 = por %p206, %p207
    %p209 = scmp.ne.s32.totalorder %s200, %s201
    %p210 = scmp.eq.s32.totalorder %s22, 0
    %p211 = por %p209, %p210
    %p212 = scmp.ne.s32.totalorder %s200, %s201
    %p213 = scmp.eq.s32.totalorder %s23, 1
    %p214 = por %p212, %p213
    %p216 = scmp.ne.s32.totalorder %s201, %s215
    %p217 = scmp.eq.s32.totalorder %s23, 0
    %p218 = por %p216, %p217
    %s220 = sadd.s32 %s219, 1
    %p223 = scmp.eq.s32.totalorder %s17, 1
    %p224 = scmp.ne.s32.totalorder %s219, %s221
    %p225 = scmp.eq.s32.totalorder %s17, 0
    %p226 = por %p224, %p225
    %p227 = scmp.ne.s32.totalorder %s219, %s221
    %p228 = scmp.eq.s32.totalorder %s22, 1
    %p229 = por %p227, %p228
    %p230 = scmp.ne.s32.totalorder %s221, %s222
    %p231 = scmp.eq.s32.totalorder %s22, 0
    %p232 = por %p230, %p231
    %p233 = scmp.ne.s32.totalorder %s221, %s222
    %p234 = scmp.eq.s32.totalorder %s23, 1
    %p235 = por %p233, %p234
    %p237 = scmp.ne.s32.totalorder %s222, %s236
    %p238 = scmp.eq.s32.totalorder %s23, 0
    %p239 = por %p237, %p238
    %s241 = sadd.s32 %s240, 1
    %p244 = scmp.eq.s32.totalorder %s17, 1
    %p245 = scmp.ne.s32.totalorder %s240, %s242
    %p246 = scmp.eq.s32.totalorder %s17, 0
    %p247 = por %p245, %p246
    %p248 = scmp.ne.s32.totalorder %s240, %s242
    %p249 = scmp.eq.s32.totalorder %s22, 1
    %p250 = por %p248, %p249
    %p251 = scmp.ne.s32.totalorder %s242, %s243
    %p252 = scmp.eq.s32.totalorder %s22, 0
    %p253 = por %p251, %p252
    %p254 = scmp.ne.s32.totalorder %s242, %s243
    %p255 = scmp.eq.s32.totalorder %s23, 1
    %p256 = por %p254, %p255
    %p258 = scmp.ne.s32.totalorder %s243, %s257
    %p259 = scmp.eq.s32.totalorder %s23, 0
    %p260 = por %p258, %p259
    %s261 = ssub.s32 %s17, %s24
    %p262 = scmp.eq.s32.totalorder %s261, 0
    %s264 = sadd.s32 %s263, 1
    %s265 = scalar_select %p262, %s263, %s264
    %p268 = pneg %p262
    %p269 = scmp.eq.s32.totalorder %s17, 1
    %p270 = por %p268, %p269
    %p271 = scmp.ne.s32.totalorder %s263, %s266
    %p272 = scmp.eq.s32.totalorder %s17, 0
    %p273 = por %p271, %p272
    %p274 = scmp.ne.s32.totalorder %s263, %s266
    %p275 = scmp.eq.s32.totalorder %s22, 1
    %p276 = por %p274, %p275
    %p277 = scmp.ne.s32.totalorder %s266, %s267
    %p278 = scmp.eq.s32.totalorder %s22, 0
    %p279 = por %p277, %p278
    %p280 = scmp.ne.s32.totalorder %s266, %s267
    %p281 = scmp.eq.s32.totalorder %s23, 1
    %p282 = por %p280, %p281
    %p284 = scmp.ne.s32.totalorder %s267, %s283
    %p285 = scmp.eq.s32.totalorder %s23, 0
    %p286 = por %p284, %p285
    %p287 = scmp.le.s32.totalorder 1, %s17
    %p288 = scmp.lt.s32.totalorder %s17, 3
    %p289 = pnand %p287, %p288
    %p290 = pneg %p289
    // Predicated region
    $region9: #{decoder_forward.1} parent=5 // pred_check
      _
    $region10: #{decoder_forward.1} parent=5 // pred_check_branch
      %292 = sbr.rel (%p289) target = $region12
    $region11: #{decoder_forward.1} parent=5 // pred_region
      %s293 = ssub.s32 %s17, 1
      // Predicated region
      $region13: #{decoder_forward.1} parent=11 // pred_check
        %p294 = pneg %p64
      $region14: #{decoder_forward.1} parent=11 // pred_check_branch
        %296 = sbr.rel (%p294) target = $region16
      $region15: #{decoder_forward.1} parent=11 // pred_region
        _
      $region16: #{decoder_forward.1} parent=11 // pred_fallthru
        _
      // Predicated region
      $region17: #{decoder_forward.1} parent=11 // pred_check
        %p297 = pneg %p85
      $region18: #{decoder_forward.1} parent=11 // pred_check_branch
        %299 = sbr.rel (%p297) target = $region20
      $region19: #{decoder_forward.1} parent=11 // pred_region
        _
      $region20: #{decoder_forward.1} parent=11 // pred_fallthru
        _
      // Predicated region
      $region21: #{decoder_forward.1} parent=11 // pred_check
        %p300 = pneg %p106
      $region22: #{decoder_forward.1} parent=11 // pred_check_branch
        %302 = sbr.rel (%p300) target = $region24
      $region23: #{decoder_forward.1} parent=11 // pred_region
        _
      $region24: #{decoder_forward.1} parent=11 // pred_fallthru
        _
      // Predicated region
      $region25: #{decoder_forward.1} parent=11 // pred_check
        %p303 = pneg %p127
      $region26: #{decoder_forward.1} parent=11 // pred_check_branch
        %305 = sbr.rel (%p303) target = $region28
      $region27: #{decoder_forward.1} parent=11 // pred_region
        _
      $region28: #{decoder_forward.1} parent=11 // pred_fallthru
        _
      // Predicated region
      $region29: #{decoder_forward.1} parent=11 // pred_check
        %p306 = pneg %p148
      $region30: #{decoder_forward.1} parent=11 // pred_check_branch
        %308 = sbr.rel (%p306) target = $region32
      $region31: #{decoder_forward.1} parent=11 // pred_region
        _
      $region32: #{decoder_forward.1} parent=11 // pred_fallthru
        _
      // Predicated region
      $region33: #{decoder_forward.1} parent=11 // pred_check
        %p309 = pneg %p169
      $region34: #{decoder_forward.1} parent=11 // pred_check_branch
        %311 = sbr.rel (%p309) target = $region36
      $region35: #{decoder_forward.1} parent=11 // pred_region
        _
      $region36: #{decoder_forward.1} parent=11 // pred_fallthru
        _
      // Predicated region
      $region37: #{decoder_forward.1} parent=11 // pred_check
        %p312 = pneg %p190
      $region38: #{decoder_forward.1} parent=11 // pred_check_branch
        %314 = sbr.rel (%p312) target = $region40
      $region39: #{decoder_forward.1} parent=11 // pred_region
        _
      $region40: #{decoder_forward.1} parent=11 // pred_fallthru
        _
      // Predicated region
      $region41: #{decoder_forward.1} parent=11 // pred_check
        %p315 = pneg %p211
      $region42: #{decoder_forward.1} parent=11 // pred_check_branch
        %317 = sbr.rel (%p315) target = $region44
      $region43: #{decoder_forward.1} parent=11 // pred_region
        _
      $region44: #{decoder_forward.1} parent=11 // pred_fallthru
        _
      // Predicated region
      $region45: #{decoder_forward.1} parent=11 // pred_check
        %p318 = pneg %p232
      $region46: #{decoder_forward.1} parent=11 // pred_check_branch
        %320 = sbr.rel (%p318) target = $region48
      $region47: #{decoder_forward.1} parent=11 // pred_region
        _
      $region48: #{decoder_forward.1} parent=11 // pred_fallthru
        _
      // Predicated region
      $region49: #{decoder_forward.1} parent=11 // pred_check
        %p321 = pneg %p253
      $region50: #{decoder_forward.1} parent=11 // pred_check_branch
        %323 = sbr.rel (%p321) target = $region52
      $region51: #{decoder_forward.1} parent=11 // pred_region
        _
      $region52: #{decoder_forward.1} parent=11 // pred_fallthru
        _
    $region12: #{decoder_forward.1} parent=5 // pred_fallthru
      _
    %p324 = scmp.lt.s32.totalorder %s17, 2
    // Predicated region
    $region53: #{decoder_forward.1} parent=5 // pred_check
      %p325 = pneg %p324
    $region54: #{decoder_forward.1} parent=5 // pred_check_branch
      %327 = sbr.rel (%p325) target = $region56
    $region55: #{decoder_forward.1} parent=5 // pred_region
      // Predicated region
      $region57: #{decoder_forward.1} parent=55 // pred_check
        %p328 = pneg %p37
      $region58: #{decoder_forward.1} parent=55 // pred_check_branch
        %330 = sbr.rel (%p328) target = $region60
      $region59: #{decoder_forward.1} parent=55 // pred_region
        %p331 = scmp.lt.s32.totalorder %s17, 1
        %s332 = scalar_select %p331, %s17, 1
        %s333 = smul.addr %s332, 8
        %s334 = scalar_lea.vmem %s0, %s333
      $region60: #{decoder_forward.1} parent=55 // pred_fallthru
        _
    $region56: #{decoder_forward.1} parent=5 // pred_fallthru
      _
    %p335 = scmp.le.s32.totalorder 1, %s17
    %p336 = scmp.lt.s32.totalorder %s17, 3
    %p337 = pnand %p335, %p336
    %p338 = pneg %p337
    // Predicated region
    $region61: #{decoder_forward.1} parent=5 // pred_check
      _
    $region62: #{decoder_forward.1} parent=5 // pred_check_branch
      %340 = sbr.rel (%p337) target = $region64
    $region63: #{decoder_forward.1} parent=5 // pred_region
      %s341 = ssub.s32 %s17, 1
      %p342 = scmp.lt.s32.totalorder %s22, 1
      %s343 = scalar_select %p342, %s22, 1
      %s344 = smul.addr %s343, 8
      %s345 = scalar_lea.vmem %s0, %s344
      %p346 = pneg %p43
      %p347 = pneg %p40
      %p348 = pneg %p64
      %p349 = pneg %p61
      %p350 = pneg %p85
      %p351 = pneg %p82
      %p352 = pneg %p106
      %p353 = pneg %p103
      %p354 = pneg %p127
      %p355 = pneg %p124
      %p356 = pneg %p148
      %p357 = pneg %p145
      %p358 = pneg %p169
      %p359 = pneg %p166
      %p360 = pneg %p190
      %p361 = pneg %p187
      %p362 = pneg %p211
      %p363 = pneg %p208
      %p364 = pneg %p232
      %p365 = pneg %p229
      %p366 = pneg %p253
      %p367 = pneg %p250
      %p368 = pneg %p279
      %p369 = pneg %p276
      %p370 = scmp.lt.s32.totalorder %s22, 1
      %s371 = scalar_select %p370, %s22, 1
      %s372 = smul.addr %s371, 8
      %s373 = scalar_lea.vmem %s11, %s372
      %p374 = scmp.lt.s32.totalorder %s22, 1
      %s375 = scalar_select %p374, %s22, 1
      %s376 = smul.addr %s375, 8
      %s377 = scalar_lea.vmem %s0, %s376
      %p378 = scmp.lt.s32.totalorder %s22, 1
      %s379 = scalar_select %p378, %s22, 1
      %s380 = smul.addr %s379, 8
      %s381 = scalar_lea.vmem %s11, %s380
      %v382 = vld [vmem:[%s377] sm:$0xff]
      %v383 = vld [vmem:[%s1] sm:$0xff]
      %v384 = vld [vmem:[%s1 + $0x8] sm:$0xff]
      %v385 = vld [vmem:[%s1 + $0x10] sm:$0xff]
      %v386 = vld [vmem:[%s1 + $0x18] sm:$0xff]
      %v387 = vld [vmem:[%s2] sm:$0x1]
      %v389 = vlaneseq
      %v390 = vshrl.u32 %v389, 7
      %v391 = vsub.s32 0, %v390
      %v392 = vrot.slane %v387, %v391
      %vm394 = vcmask 261120
      %v396 = vsel %vm394, %v382, 0
      %398 = vmatprep.subr.mxu0 0.0
      %399 = vmatpush1.msra.mxu0 %v383
      %400 = vmatprep.subr.mxu0 0.0
      %401 = vmatpush1.msra.mxu0 %v384
      %402 = vmatprep.subr.mxu0 0.0
      %403 = vmatpush1.msra.mxu0 %v385
      %404 = vmatprep.subr.mxu0 0.0
      %405 = vmatpush1.msra.mxu0 %v386
      %406 = vmatprep.subr.mxu0 0.0
      %407 = vmatpush1.msra.mxu0 0.0
      %408 = vmatprep.subr.mxu0 0.0
      %409 = vmatpush1.msra.mxu0 0.0
      %410 = vmatprep.subr.mxu0 0.0
      %411 = vmatpush1.msra.mxu0 0.0
      %412 = vmatprep.subr.mxu0 0.0
      %413 = vmatpush1.msra.mxu0 0.0
      %414 = vmatprep.subr.mxu0 0.0
      %415 = vmatpush1.msra.mxu0 0.0
      %416 = vmatprep.subr.mxu0 0.0
      %417 = vmatpush1.msra.mxu0 0.0
      %418 = vmatprep.subr.mxu0 0.0
      %419 = vmatpush1.msra.mxu0 0.0
      %420 = vmatprep.subr.mxu0 0.0
      %421 = vmatpush1.msra.mxu0 0.0
      %422 = vmatprep.subr.mxu0 0.0
      %423 = vmatpush1.msra.mxu0 0.0
      %424 = vmatprep.subr.mxu0 0.0
      %425 = vmatpush1.msra.mxu0 0.0
      %426 = vmatprep.subr.mxu0 0.0
      %427 = vmatpush1.msra.mxu0 0.0
      %428 = vmatprep.subr.mxu0 0.0
      %429 = vmatpush1.msra.mxu0 0.0
      %430 = vmatprep.subr.mxu0 0.0
      %431 = vmatpush1.msra.mxu0 0.0
      %432 = vmatprep.subr.mxu0 0.0
      %433 = vmatpush1.msra.mxu0 0.0
      %434 = vmatprep.subr.mxu0 0.0
      %435 = vmatpush1.msra.mxu0 0.0
      %436 = vmatprep.subr.mxu0 0.0
      %437 = vmatpush1.msra.mxu0 0.0
      %438 = vmatprep.subr.mxu0 0.0
      %439 = vmatpush1.msra.mxu0 0.0
      %440 = vmatprep.subr.mxu0 0.0
      %441 = vmatpush1.msra.mxu0 0.0
      %442 = vmatprep.subr.mxu0 0.0
      %443 = vmatpush1.msra.mxu0 0.0
      %444 = vmatprep.subr.mxu0 0.0
      %445 = vmatpush1.msra.mxu0 0.0
      %446 = vmatprep.subr.mxu0 0.0
      %447 = vmatpush1.msra.mxu0 0.0
      %448 = vmatprep.subr.mxu0 0.0
      %449 = vmatpush1.msra.mxu0 0.0
      %450 = vmatprep.subr.mxu0 0.0
      %451 = vmatpush1.msra.mxu0 0.0
      %452 = vmatprep.subr.mxu0 0.0
      %453 = vmatpush1.msra.mxu0 0.0
      %454 = vmatprep.subr.mxu0 0.0
      %455 = vmatpush1.msra.mxu0 0.0
      %456 = vmatprep.subr.mxu0 0.0
      %457 = vmatpush1.msra.mxu0 0.0
      %458 = vmatprep.subr.mxu0 0.0
      %459 = vmatpush1.msra.mxu0 0.0
      %460 = vmatprep.subr.mxu0 0.0
      %461 = vmatpush1.msra.mxu0 0.0
      %462 = vmatprep.mubr.f32.mxu0 0.0
      %463 = vmatmul.mubr.f32.gmra.mrb[0].mxu0 %v396
      %v464 = vpop.f32.mrb[0].mxu0
      %v465 = vadd.f32 %v392, %v464
      %v466 = vpop.f32.mrb[0].mxu0
      %467 = vdwg.mxu0
      %v468 = vmax.f32 %v465, 0.0
      %v470 = vrot.slane %v468, 7
      %vm472 = vcmask 1040384
      %v473 = vsel %vm472, 0.0, %v470
      %v474 = vrot.slane %v468, 1
      %vm476 = vcmask 1046528
      %v477 = vsel %vm476, %v474, 0.0
      %v478 = vld [vmem:[%s3] sm:$0xff]
      %v479 = vld [vmem:[%s3 + $0x8] sm:$0xff]
      %v480 = vld [vmem:[%s3 + $0x10] sm:$0xff]
      %v481 = vld [vmem:[%s3 + $0x18] sm:$0xff]
      %v482 = vld [vmem:[%s4] sm:$0xff]
      %v483 = vld [vmem:[%s4 + $0x8] sm:$0xff]
      %v484 = vld [vmem:[%s4 + $0x10] sm:$0xff]
      %v485 = vld [vmem:[%s4 + $0x18] sm:$0xff]
      %v486 = vsel %vm394, %v468, 0
      %488 = vmatprep.subr.mxu0 0.0
      %489 = vmatpush1.msra.mxu0 %v482
      %490 = vmatprep.subr.mxu0 0.0
      %491 = vmatpush1.msra.mxu0 %v483
      %492 = vmatprep.subr.mxu0 0.0
      %493 = vmatpush1.msra.mxu0 %v484
      %494 = vmatprep.subr.mxu0 0.0
      %495 = vmatpush1.msra.mxu0 %v485
      %496 = vmatprep.subr.mxu0 0.0
      %497 = vmatpush1.msra.mxu0 0.0
      %498 = vmatprep.subr.mxu0 0.0
      %499 = vmatpush1.msra.mxu0 0.0
      %500 = vmatprep.subr.mxu0 0.0
      %501 = vmatpush1.msra.mxu0 0.0
      %502 = vmatprep.subr.mxu0 0.0
      %503 = vmatpush1.msra.mxu0 0.0
      %504 = vmatprep.subr.mxu0 0.0
      %505 = vmatpush1.msra.mxu0 0.0
      %506 = vmatprep.subr.mxu0 0.0
      %507 = vmatpush1.msra.mxu0 0.0
      %508 = vmatprep.subr.mxu0 0.0
      %509 = vmatpush1.msra.mxu0 0.0
      %510 = vmatprep.subr.mxu0 0.0
      %511 = vmatpush1.msra.mxu0 0.0
      %512 = vmatprep.subr.mxu0 0.0
      %513 = vmatpush1.msra.mxu0 0.0
      %514 = vmatprep.subr.mxu0 0.0
      %515 = vmatpush1.msra.mxu0 0.0
      %516 = vmatprep.subr.mxu0 0.0
      %517 = vmatpush1.msra.mxu0 0.0
      %518 = vmatprep.subr.mxu0 0.0
      %519 = vmatpush1.msra.mxu0 0.0
      %520 = vmatprep.subr.mxu0 0.0
      %521 = vmatpush1.msra.mxu0 0.0
      %522 = vmatprep.subr.mxu0 0.0
      %523 = vmatpush1.msra.mxu0 0.0
      %524 = vmatprep.subr.mxu0 0.0
      %525 = vmatpush1.msra.mxu0 0.0
      %526 = vmatprep.subr.mxu0 0.0
      %527 = vmatpush1.msra.mxu0 0.0
      %528 = vmatprep.subr.mxu0 0.0
      %529 = vmatpush1.msra.mxu0 0.0
      %530 = vmatprep.subr.mxu0 0.0
      %531 = vmatpush1.msra.mxu0 0.0
      %532 = vmatprep.subr.mxu0 0.0
      %533 = vmatpush1.msra.mxu0 0.0
      %534 = vmatprep.subr.mxu0 0.0
      %535 = vmatpush1.msra.mxu0 0.0
      %536 = vmatprep.subr.mxu0 0.0
      %537 = vmatpush1.msra.mxu0 0.0
      %538 = vmatprep.subr.mxu0 0.0
      %539 = vmatpush1.msra.mxu0 0.0
      %540 = vmatprep.subr.mxu0 0.0
      %541 = vmatpush1.msra.mxu0 0.0
      %542 = vmatprep.subr.mxu0 0.0
      %543 = vmatpush1.msra.mxu0 0.0
      %544 = vmatprep.subr.mxu0 0.0
      %545 = vmatpush1.msra.mxu0 0.0
      %546 = vmatprep.subr.mxu0 0.0
      %547 = vmatpush1.msra.mxu0 0.0
      %548 = vmatprep.subr.mxu0 0.0
      %549 = vmatpush1.msra.mxu0 0.0
      %550 = vmatprep.subr.mxu0 0.0
      %551 = vmatpush1.msra.mxu0 0.0
      %552 = vmatprep.mubr.f32.mxu0 0.0
      %553 = vmatmul.mubr.f32.gmra.mrb[0].mxu0 %v486
      %v554 = vpop.f32.mrb[0].mxu0
      %v555 = vadd.f32 0.0, %v554
      %v556 = vpop.f32.mrb[0].mxu0
      %557 = vdwg.mxu0
      %v559 = vsel %vm394, %v473, 0
      %561 = vmatprep.subr.mxu0 0.0
      %562 = vmatpush1.msra.mxu0 %v478
      %563 = vmatprep.subr.mxu0 0.0
      %564 = vmatpush1.msra.mxu0 %v479
      %565 = vmatprep.subr.mxu0 0.0
      %566 = vmatpush1.msra.mxu0 %v480
      %567 = vmatprep.subr.mxu0 0.0
      %568 = vmatpush1.msra.mxu0 %v481
      %569 = vmatprep.subr.mxu0 0.0
      %570 = vmatpush1.msra.mxu0 0.0
      %571 = vmatprep.subr.mxu0 0.0
      %572 = vmatpush1.msra.mxu0 0.0
      %573 = vmatprep.subr.mxu0 0.0
      %574 = vmatpush1.msra.mxu0 0.0
      %575 = vmatprep.subr.mxu0 0.0
      %576 = vmatpush1.msra.mxu0 0.0
      %577 = vmatprep.subr.mxu0 0.0
      %578 = vmatpush1.msra.mxu0 0.0
      %579 = vmatprep.subr.mxu0 0.0
      %580 = vmatpush1.msra.mxu0 0.0
      %581 = vmatprep.subr.mxu0 0.0
      %582 = vmatpush1.msra.mxu0 0.0
      %583 = vmatprep.subr.mxu0 0.0
      %584 = vmatpush1.msra.mxu0 0.0
      %585 = vmatprep.subr.mxu0 0.0
      %586 = vmatpush1.msra.mxu0 0.0
      %587 = vmatprep.subr.mxu0 0.0
      %588 = vmatpush1.msra.mxu0 0.0
      %589 = vmatprep.subr.mxu0 0.0
      %590 = vmatpush1.msra.mxu0 0.0
      %591 = vmatprep.subr.mxu0 0.0
      %592 = vmatpush1.msra.mxu0 0.0
      %593 = vmatprep.subr.mxu0 0.0
      %594 = vmatpush1.msra.mxu0 0.0
      %595 = vmatprep.subr.mxu0 0.0
      %596 = vmatpush1.msra.mxu0 0.0
      %597 = vmatprep.subr.mxu0 0.0
      %598 = vmatpush1.msra.mxu0 0.0
      %599 = vmatprep.subr.mxu0 0.0
      %600 = vmatpush1.msra.mxu0 0.0
      %601 = vmatprep.subr.mxu0 0.0
      %602 = vmatpush1.msra.mxu0 0.0
      %603 = vmatprep.subr.mxu0 0.0
      %604 = vmatpush1.msra.mxu0 0.0
      %605 = vmatprep.subr.mxu0 0.0
      %606 = vmatpush1.msra.mxu0 0.0
      %607 = vmatprep.subr.mxu0 0.0
      %608 = vmatpush1.msra.mxu0 0.0
      %609 = vmatprep.subr.mxu0 0.0
      %610 = vmatpush1.msra.mxu0 0.0
      %611 = vmatprep.subr.mxu0 0.0
      %612 = vmatpush1.msra.mxu0 0.0
      %613 = vmatprep.subr.mxu0 0.0
      %614 = vmatpush1.msra.mxu0 0.0
      %615 = vmatprep.subr.mxu0 0.0
      %616 = vmatpush1.msra.mxu0 0.0
      %617 = vmatprep.subr.mxu0 0.0
      %618 = vmatpush1.msra.mxu0 0.0
      %619 = vmatprep.subr.mxu0 0.0
      %620 = vmatpush1.msra.mxu0 0.0
      %621 = vmatprep.subr.mxu0 0.0
      %622 = vmatpush1.msra.mxu0 0.0
      %623 = vmatprep.subr.mxu0 0.0
      %624 = vmatpush1.msra.mxu0 0.0
      %625 = vmatprep.mubr.f32.mxu0 0.0
      %626 = vmatmul.mubr.f32.gmra.mrb[0].mxu0 %v559
      %v627 = vpop.f32.mrb[0].mxu0
      %v628 = vadd.f32 %v555, %v627
      %v629 = vpop.f32.mrb[0].mxu0
      %630 = vdwg.mxu0
      %v631 = vld [vmem:[%s5] sm:$0xff]
      %v632 = vld [vmem:[%s5 + $0x8] sm:$0xff]
      %v633 = vld [vmem:[%s5 + $0x10] sm:$0xff]
      %v634 = vld [vmem:[%s5 + $0x18] sm:$0xff]
      %v636 = vsel %vm394, %v477, 0
      %638 = vmatprep.subr.mxu0 0.0
      %639 = vmatpush1.msra.mxu0 %v631
      %640 = vmatprep.subr.mxu0 0.0
      %641 = vmatpush1.msra.mxu0 %v632
      %642 = vmatprep.subr.mxu0 0.0
      %643 = vmatpush1.msra.mxu0 %v633
      %644 = vmatprep.subr.mxu0 0.0
      %645 = vmatpush1.msra.mxu0 %v634
      %646 = vmatprep.subr.mxu0 0.0
      %647 = vmatpush1.msra.mxu0 0.0
      %648 = vmatprep.subr.mxu0 0.0
      %649 = vmatpush1.msra.mxu0 0.0
      %650 = vmatprep.subr.mxu0 0.0
      %651 = vmatpush1.msra.mxu0 0.0
      %652 = vmatprep.subr.mxu0 0.0
      %653 = vmatpush1.msra.mxu0 0.0
      %654 = vmatprep.subr.mxu0 0.0
      %655 = vmatpush1.msra.mxu0 0.0
      %656 = vmatprep.subr.mxu0 0.0
      %657 = vmatpush1.msra.mxu0 0.0
      %658 = vmatprep.subr.mxu0 0.0
      %659 = vmatpush1.msra.mxu0 0.0
      %660 = vmatprep.subr.mxu0 0.0
      %661 = vmatpush1.msra.mxu0 0.0
      %662 = vmatprep.subr.mxu0 0.0
      %663 = vmatpush1.msra.mxu0 0.0
      %664 = vmatprep.subr.mxu0 0.0
      %665 = vmatpush1.msra.mxu0 0.0
      %666 = vmatprep.subr.mxu0 0.0
      %667 = vmatpush1.msra.mxu0 0.0
      %668 = vmatprep.subr.mxu0 0.0
      %669 = vmatpush1.msra.mxu0 0.0
      %670 = vmatprep.subr.mxu0 0.0
      %671 = vmatpush1.msra.mxu0 0.0
      %672 = vmatprep.subr.mxu0 0.0
      %673 = vmatpush1.msra.mxu0 0.0
      %674 = vmatprep.subr.mxu0 0.0
      %675 = vmatpush1.msra.mxu0 0.0
      %676 = vmatprep.subr.mxu0 0.0
      %677 = vmatpush1.msra.mxu0 0.0
      %678 = vmatprep.subr.mxu0 0.0
      %679 = vmatpush1.msra.mxu0 0.0
      %680 = vmatprep.subr.mxu0 0.0
      %681 = vmatpush1.msra.mxu0 0.0
      %682 = vmatprep.subr.mxu0 0.0
      %683 = vmatpush1.msra.mxu0 0.0
      %684 = vmatprep.subr.mxu0 0.0
      %685 = vmatpush1.msra.mxu0 0.0
      %686 = vmatprep.subr.mxu0 0.0
      %687 = vmatpush1.msra.mxu0 0.0
      %688 = vmatprep.subr.mxu0 0.0
      %689 = vmatpush1.msra.mxu0 0.0
      %690 = vmatprep.subr.mxu0 0.0
      %691 = vmatpush1.msra.mxu0 0.0
      %692 = vmatprep.subr.mxu0 0.0
      %693 = vmatpush1.msra.mxu0 0.0
      %694 = vmatprep.subr.mxu0 0.0
      %695 = vmatpush1.msra.mxu0 0.0
      %696 = vmatprep.subr.mxu0 0.0
      %697 = vmatpush1.msra.mxu0 0.0
      %698 = vmatprep.subr.mxu0 0.0
      %699 = vmatpush1.msra.mxu0 0.0
      %700 = vmatprep.subr.mxu0 0.0
      %701 = vmatpush1.msra.mxu0 0.0
      %702 = vmatprep.mubr.f32.mxu0 0.0
      %703 = vmatmul.mubr.f32.gmra.mrb[0].mxu0 %v636
      %v704 = vpop.f32.mrb[0].mxu0
      %v705 = vadd.f32 0.0, %v704
      %v706 = vpop.f32.mrb[0].mxu0
      %707 = vdwg.mxu0
      %v708 = vadd.f32 %v628, %v705
      %v709 = vld [vmem:[%s6] sm:$0x1]
      %v711 = vlaneseq
      %v712 = vshrl.u32 %v711, 7
      %v713 = vsub.s32 0, %v712
      %v714 = vrot.slane %v709, %v713
      %v716 = vadd.f32 %v708, %v714
      %v717 = vmax.f32 %v716, 0.0
      %v719 = vrot.slane %v717, 7
      %v721 = vsel %vm472, 0.0, %v719
      %v722 = vrot.slane %v717, 1
      %v724 = vsel %vm476, %v722, 0.0
      %v725 = vld [vmem:[%s7] sm:$0xff]
      %v726 = vld [vmem:[%s7 + $0x8] sm:$0xff]
      %v727 = vld [vmem:[%s7 + $0x10] sm:$0xff]
      %v728 = vld [vmem:[%s7 + $0x18] sm:$0xff]
      %v729 = vld [vmem:[%s7 + $0x20] sm:$0xff]
      %v730 = vld [vmem:[%s7 + $0x28] sm:$0xff]
      %v731 = vld [vmem:[%s7 + $0x30] sm:$0xff]
      %v732 = vld [vmem:[%s7 + $0x38] sm:$0xff]
      %v733 = vld [vmem:[%s7 + $0x40] sm:$0xff]
      %v734 = vld [vmem:[%s7 + $0x48] sm:$0xff]
      %v735 = vld [vmem:[%s7 + $0x50] sm:$0xff]
      %v736 = vld [vmem:[%s7 + $0x58] sm:$0xff]
      %v737 = vld [vmem:[%s7 + $0x60] sm:$0xff]
      %v738 = vld [vmem:[%s7 + $0x68] sm:$0xff]
      %v739 = vld [vmem:[%s7 + $0x70] sm:$0xff]
      %v740 = vld [vmem:[%s7 + $0x78] sm:$0xff]
      %v741 = vld [vmem:[%s8] sm:$0xff]
      %v742 = vld [vmem:[%s8 + $0x8] sm:$0xff]
      %v743 = vld [vmem:[%s8 + $0x10] sm:$0xff]
      %v744 = vld [vmem:[%s8 + $0x18] sm:$0xff]
      %v745 = vld [vmem:[%s8 + $0x20] sm:$0xff]
      %v746 = vld [vmem:[%s8 + $0x28] sm:$0xff]
      %v747 = vld [vmem:[%s8 + $0x30] sm:$0xff]
      %v748 = vld [vmem:[%s8 + $0x38] sm:$0xff]
      %v749 = vld [vmem:[%s8 + $0x40] sm:$0xff]
      %v750 = vld [vmem:[%s8 + $0x48] sm:$0xff]
      %v751 = vld [vmem:[%s8 + $0x50] sm:$0xff]
      %v752 = vld [vmem:[%s8 + $0x58] sm:$0xff]
      %v753 = vld [vmem:[%s8 + $0x60] sm:$0xff]
      %v754 = vld [vmem:[%s8 + $0x68] sm:$0xff]
      %v755 = vld [vmem:[%s8 + $0x70] sm:$0xff]
      %v756 = vld [vmem:[%s8 + $0x78] sm:$0xff]
      %757 = vmatprep.subr.mxu0 0.0
      %758 = vmatpush1.msra.mxu0 %v741
      %759 = vmatprep.subr.mxu0 0.0
      %760 = vmatpush1.msra.mxu0 %v742
      %761 = vmatprep.subr.mxu0 0.0
      %762 = vmatpush1.msra.mxu0 %v743
      %763 = vmatprep.subr.mxu0 0.0
      %764 = vmatpush1.msra.mxu0 %v744
      %765 = vmatprep.subr.mxu0 0.0
      %766 = vmatpush1.msra.mxu0 %v745
      %767 = vmatprep.subr.mxu0 0.0
      %768 = vmatpush1.msra.mxu0 %v746
      %769 = vmatprep.subr.mxu0 0.0
      %770 = vmatpush1.msra.mxu0 %v747
      %771 = vmatprep.subr.mxu0 0.0
      %772 = vmatpush1.msra.mxu0 %v748
      %773 = vmatprep.subr.mxu0 0.0
      %774 = vmatpush1.msra.mxu0 %v749
      %775 = vmatprep.subr.mxu0 0.0
      %776 = vmatpush1.msra.mxu0 %v750
      %777 = vmatprep.subr.mxu0 0.0
      %778 = vmatpush1.msra.mxu0 %v751
      %779 = vmatprep.subr.mxu0 0.0
      %780 = vmatpush1.msra.mxu0 %v752
      %781 = vmatprep.subr.mxu0 0.0
      %782 = vmatpush1.msra.mxu0 %v753
      %783 = vmatprep.subr.mxu0 0.0
      %784 = vmatpush1.msra.mxu0 %v754
      %785 = vmatprep.subr.mxu0 0.0
      %786 = vmatpush1.msra.mxu0 %v755
      %787 = vmatprep.subr.mxu0 0.0
      %788 = vmatpush1.msra.mxu0 %v756
      %789 = vmatprep.subr.mxu0 0.0
      %790 = vmatpush1.msra.mxu0 0.0
      %791 = vmatprep.subr.mxu0 0.0
      %792 = vmatpush1.msra.mxu0 0.0
      %793 = vmatprep.subr.mxu0 0.0
      %794 = vmatpush1.msra.mxu0 0.0
      %795 = vmatprep.subr.mxu0 0.0
      %796 = vmatpush1.msra.mxu0 0.0
      %797 = vmatprep.subr.mxu0 0.0
      %798 = vmatpush1.msra.mxu0 0.0
      %799 = vmatprep.subr.mxu0 0.0
      %800 = vmatpush1.msra.mxu0 0.0
      %801 = vmatprep.subr.mxu0 0.0
      %802 = vmatpush1.msra.mxu0 0.0
      %803 = vmatprep.subr.mxu0 0.0
      %804 = vmatpush1.msra.mxu0 0.0
      %805 = vmatprep.subr.mxu0 0.0
      %806 = vmatpush1.msra.mxu0 0.0
      %807 = vmatprep.subr.mxu0 0.0
      %808 = vmatpush1.msra.mxu0 0.0
      %809 = vmatprep.subr.mxu0 0.0
      %810 = vmatpush1.msra.mxu0 0.0
      %811 = vmatprep.subr.mxu0 0.0
      %812 = vmatpush1.msra.mxu0 0.0
      %813 = vmatprep.subr.mxu0 0.0
      %814 = vmatpush1.msra.mxu0 0.0
      %815 = vmatprep.subr.mxu0 0.0
      %816 = vmatpush1.msra.mxu0 0.0
      %817 = vmatprep.subr.mxu0 0.0
      %818 = vmatpush1.msra.mxu0 0.0
      %819 = vmatprep.subr.mxu0 0.0
      %820 = vmatpush1.msra.mxu0 0.0
      %821 = vmatprep.mubr.f32.mxu0 0.0
      %822 = vmatmul.mubr.f32.gmra.mrb[0].mxu0 %v717
      %v823 = vpop.f32.mrb[0].mxu0
      %v824 = vadd.f32 0.0, %v823
      %v825 = vpop.f32.mrb[0].mxu0
      %826 = vdwg.mxu0
      %827 = vmatprep.subr.mxu0 0.0
      %828 = vmatpush1.msra.mxu0 %v725
      %829 = vmatprep.subr.mxu0 0.0
      %830 = vmatpush1.msra.mxu0 %v726
      %831 = vmatprep.subr.mxu0 0.0
      %832 = vmatpush1.msra.mxu0 %v727
      %833 = vmatprep.subr.mxu0 0.0
      %834 = vmatpush1.msra.mxu0 %v728
      %835 = vmatprep.subr.mxu0 0.0
      %836 = vmatpush1.msra.mxu0 %v729
      %837 = vmatprep.subr.mxu0 0.0
      %838 = vmatpush1.msra.mxu0 %v730
      %839 = vmatprep.subr.mxu0 0.0
      %840 = vmatpush1.msra.mxu0 %v731
      %841 = vmatprep.subr.mxu0 0.0
      %842 = vmatpush1.msra.mxu0 %v732
      %843 = vmatprep.subr.mxu0 0.0
      %844 = vmatpush1.msra.mxu0 %v733
      %845 = vmatprep.subr.mxu0 0.0
      %846 = vmatpush1.msra.mxu0 %v734
      %847 = vmatprep.subr.mxu0 0.0
      %848 = vmatpush1.msra.mxu0 %v735
      %849 = vmatprep.subr.mxu0 0.0
      %850 = vmatpush1.msra.mxu0 %v736
      %851 = vmatprep.subr.mxu0 0.0
      %852 = vmatpush1.msra.mxu0 %v737
      %853 = vmatprep.subr.mxu0 0.0
      %854 = vmatpush1.msra.mxu0 %v738
      %855 = vmatprep.subr.mxu0 0.0
      %856 = vmatpush1.msra.mxu0 %v739
      %857 = vmatprep.subr.mxu0 0.0
      %858 = vmatpush1.msra.mxu0 %v740
      %859 = vmatprep.subr.mxu0 0.0
      %860 = vmatpush1.msra.mxu0 0.0
      %861 = vmatprep.subr.mxu0 0.0
      %862 = vmatpush1.msra.mxu0 0.0
      %863 = vmatprep.subr.mxu0 0.0
      %864 = vmatpush1.msra.mxu0 0.0
      %865 = vmatprep.subr.mxu0 0.0
      %866 = vmatpush1.msra.mxu0 0.0
      %867 = vmatprep.subr.mxu0 0.0
      %868 = vmatpush1.msra.mxu0 0.0
      %869 = vmatprep.subr.mxu0 0.0
      %870 = vmatpush1.msra.mxu0 0.0
      %871 = vmatprep.subr.mxu0 0.0
      %872 = vmatpush1.msra.mxu0 0.0
      %873 = vmatprep.subr.mxu0 0.0
      %874 = vmatpush1.msra.mxu0 0.0
      %875 = vmatprep.subr.mxu0 0.0
      %876 = vmatpush1.msra.mxu0 0.0
      %877 = vmatprep.subr.mxu0 0.0
      %878 = vmatpush1.msra.mxu0 0.0
      %879 = vmatprep.subr.mxu0 0.0
      %880 = vmatpush1.msra.mxu0 0.0
      %881 = vmatprep.subr.mxu0 0.0
      %882 = vmatpush1.msra.mxu0 0.0
      %883 = vmatprep.subr.mxu0 0.0
      %884 = vmatpush1.msra.mxu0 0.0
      %885 = vmatprep.subr.mxu0 0.0
      %886 = vmatpush1.msra.mxu0 0.0
      %887 = vmatprep.subr.mxu0 0.0
      %888 = vmatpush1.msra.mxu0 0.0
      %889 = vmatprep.subr.mxu0 0.0
      %890 = vmatpush1.msra.mxu0 0.0
      %891 = vmatprep.mubr.f32.mxu0 0.0
      %892 = vmatmul.mubr.f32.gmra.mrb[0].mxu0 %v721
      %v893 = vpop.f32.mrb[0].mxu0
      %v894 = vadd.f32 %v824, %v893
      %v895 = vpop.f32.mrb[0].mxu0
      %896 = vdwg.mxu0
      %v897 = vld [vmem:[%s9] sm:$0xff]
      %v898 = vld [vmem:[%s9 + $0x8] sm:$0xff]
      %v899 = vld [vmem:[%s9 + $0x10] sm:$0xff]
      %v900 = vld [vmem:[%s9 + $0x18] sm:$0xff]
      %v901 = vld [vmem:[%s9 + $0x20] sm:$0xff]
      %v902 = vld [vmem:[%s9 + $0x28] sm:$0xff]
      %v903 = vld [vmem:[%s9 + $0x30] sm:$0xff]
      %v904 = vld [vmem:[%s9 + $0x38] sm:$0xff]
      %v905 = vld [vmem:[%s9 + $0x40] sm:$0xff]
      %v906 = vld [vmem:[%s9 + $0x48] sm:$0xff]
      %v907 = vld [vmem:[%s9 + $0x50] sm:$0xff]
      %v908 = vld [vmem:[%s9 + $0x58] sm:$0xff]
      %v909 = vld [vmem:[%s9 + $0x60] sm:$0xff]
      %v910 = vld [vmem:[%s9 + $0x68] sm:$0xff]
      %v911 = vld [vmem:[%s9 + $0x70] sm:$0xff]
      %v912 = vld [vmem:[%s9 + $0x78] sm:$0xff]
      %913 = vmatprep.subr.mxu0 0.0
      %914 = vmatpush1.msra.mxu0 %v897
      %915 = vmatprep.subr.mxu0 0.0
      %916 = vmatpush1.msra.mxu0 %v898
      %917 = vmatprep.subr.mxu0 0.0
      %918 = vmatpush1.msra.mxu0 %v899
      %919 = vmatprep.subr.mxu0 0.0
      %920 = vmatpush1.msra.mxu0 %v900
      %921 = vmatprep.subr.mxu0 0.0
      %922 = vmatpush1.msra.mxu0 %v901
      %923 = vmatprep.subr.mxu0 0.0
      %924 = vmatpush1.msra.mxu0 %v902
      %925 = vmatprep.subr.mxu0 0.0
      %926 = vmatpush1.msra.mxu0 %v903
      %927 = vmatprep.subr.mxu0 0.0
      %928 = vmatpush1.msra.mxu0 %v904
      %929 = vmatprep.subr.mxu0 0.0
      %930 = vmatpush1.msra.mxu0 %v905
      %931 = vmatprep.subr.mxu0 0.0
      %932 = vmatpush1.msra.mxu0 %v906
      %933 = vmatprep.subr.mxu0 0.0
      %934 = vmatpush1.msra.mxu0 %v907
      %935 = vmatprep.subr.mxu0 0.0
      %936 = vmatpush1.msra.mxu0 %v908
      %937 = vmatprep.subr.mxu0 0.0
      %938 = vmatpush1.msra.mxu0 %v909
      %939 = vmatprep.subr.mxu0 0.0
      %940 = vmatpush1.msra.mxu0 %v910
      %941 = vmatprep.subr.mxu0 0.0
      %942 = vmatpush1.msra.mxu0 %v911
      %943 = vmatprep.subr.mxu0 0.0
      %944 = vmatpush1.msra.mxu0 %v912
      %945 = vmatprep.subr.mxu0 0.0
      %946 = vmatpush1.msra.mxu0 0.0
      %947 = vmatprep.subr.mxu0 0.0
      %948 = vmatpush1.msra.mxu0 0.0
      %949 = vmatprep.subr.mxu0 0.0
      %950 = vmatpush1.msra.mxu0 0.0
      %951 = vmatprep.subr.mxu0 0.0
      %952 = vmatpush1.msra.mxu0 0.0
      %953 = vmatprep.subr.mxu0 0.0
      %954 = vmatpush1.msra.mxu0 0.0
      %955 = vmatprep.subr.mxu0 0.0
      %956 = vmatpush1.msra.mxu0 0.0
      %957 = vmatprep.subr.mxu0 0.0
      %958 = vmatpush1.msra.mxu0 0.0
      %959 = vmatprep.subr.mxu0 0.0
      %960 = vmatpush1.msra.mxu0 0.0
      %961 = vmatprep.subr.mxu0 0.0
      %962 = vmatpush1.msra.mxu0 0.0
      %963 = vmatprep.subr.mxu0 0.0
      %964 = vmatpush1.msra.mxu0 0.0
      %965 = vmatprep.subr.mxu0 0.0
      %966 = vmatpush1.msra.mxu0 0.0
      %967 = vmatprep.subr.mxu0 0.0
      %968 = vmatpush1.msra.mxu0 0.0
      %969 = vmatprep.subr.mxu0 0.0
      %970 = vmatpush1.msra.mxu0 0.0
      %971 = vmatprep.subr.mxu0 0.0
      %972 = vmatpush1.msra.mxu0 0.0
      %973 = vmatprep.subr.mxu0 0.0
      %974 = vmatpush1.msra.mxu0 0.0
      %975 = vmatprep.subr.mxu0 0.0
      %976 = vmatpush1.msra.mxu0 0.0
      %977 = vmatprep.mubr.f32.mxu0 0.0
      %978 = vmatmul.mubr.f32.gmra.mrb[0].mxu0 %v724
      %v979 = vpop.f32.mrb[0].mxu0
      %v980 = vadd.f32 0.0, %v979
      %v981 = vpop.f32.mrb[0].mxu0
      %982 = vdwg.mxu0
      %v983 = vadd.f32 %v894, %v980
      %v984 = vld [vmem:[%s10] sm:$0x1]
      %v986 = vlaneseq
      %v987 = vshrl.u32 %v986, 7
      %v988 = vsub.s32 0, %v987
      %v989 = vrot.slane %v984, %v988
      %v991 = vadd.f32 %v983, %v989
      %v992 = vxor.u32 %v991, 2147483648
      %v993 = vmul.f32 %v992, 1.442695
      %v994 = vpow.pop %v993
      %v995 = vadd.f32 %v994, 1.0
      %v996 = vrcp.pop %v995
      %v997 = vmul.f32 1.0, %v996
      %vm998 = vcmask 64512
      %999 = vst.msk [vmem:[%s381] sm:$0xff] %vm998, %v997
      %p1000 = scmp.lt.s32.totalorder %s22, 1
      %s1001 = scalar_select %p1000, %s22, 1
      %s1002 = smul.addr %s1001, 8
      %s1003 = scalar_lea.vmem %s11, %s1002
      // Predicated region
      $region65: #{decoder_forward.1} parent=63 // pred_check
        %p1004 = pneg %p276
      $region66: #{decoder_forward.1} parent=63 // pred_check_branch
        %1006 = sbr.rel (%p1004) target = $region68
      $region67: #{decoder_forward.1} parent=63 // pred_region
        _
      $region68: #{decoder_forward.1} parent=63 // pred_fallthru
        _
    $region64: #{decoder_forward.1} parent=5 // pred_fallthru
      _
    %p1007 = scmp.le.s32.totalorder 2, %s17
    // Predicated region
    $region69: #{decoder_forward.1} parent=5 // pred_check
      %p1008 = pneg %p1007
    $region70: #{decoder_forward.1} parent=5 // pred_check_branch
      %1010 = sbr.rel (%p1008) target = $region72
    $region71: #{decoder_forward.1} parent=5 // pred_region
      %s1011 = ssub.s32 %s17, 2
      // Predicated region
      $region73: #{decoder_forward.1} parent=71 // pred_check
        %p1012 = pneg %p282
      $region74: #{decoder_forward.1} parent=71 // pred_check_branch
        %1014 = sbr.rel (%p1012) target = $region76
      $region75: #{decoder_forward.1} parent=71 // pred_region
        %p1015 = scmp.lt.s32.totalorder %s23, 1
        %s1016 = scalar_select %p1015, %s23, 1
        %s1017 = smul.addr %s1016, 8
        %s1018 = scalar_lea.vmem %s11, %s1017
      $region76: #{decoder_forward.1} parent=71 // pred_fallthru
        _
    $region72: #{decoder_forward.1} parent=5 // pred_fallthru
      _
  $region6: #{decoder_forward.1} parent=0 // loop_footer
    %s21 = sadd.s32 1, %s17
  $region7: #{decoder_forward.1} parent=0 // loop_footer_branch
    %16 = sbr.rel target = $region3
  $region8: #{decoder_forward.1} parent=0 // loop_exit
    _

</llo_original>
